<compile_context>
chip_gen: v7x
topology: tpu7x:2x2x1
jax: 0.10.0
libtpu: 0.0.40
codegen_flags: <defaults>
</compile_context>

<pallas_src>
import functools

import jax
import jax.numpy as jnp
from jax.experimental import pallas as pl
from jax.experimental.pallas import tpu as pltpu


# --------------------------------------------------------------------------
# Kernel body: exp (or other link) of the per-row raw variance, broadcast
# across lanes and stored. One broadcast store per tile, no other VPU work.
# --------------------------------------------------------------------------
def _make_fill_kernel(link):
    def kernel(v_ref, o_ref):
        v = v_ref[...]  # (block_rows, 1), f32 raw parameter
        if link == "exp":
            var = jnp.exp(v)                    # EUP, f32
        elif link == "softplus":
            var = jax.nn.softplus(v)
        elif link == "relu":
            var = jnp.maximum(v, 0.0)
        else:
            raise NotImplementedError("Link function is not supported.")
        o_ref[...] = jnp.broadcast_to(var, o_ref.shape).astype(o_ref.dtype)

    return kernel


# --------------------------------------------------------------------------
# Wrapper: fill an (R, M) slab where row r takes value lf(raw[r]).
# --------------------------------------------------------------------------
def _constant_fill(raw_rows, M, *, link="exp", out_dtype=jnp.float32,
                   target_block_bytes=8 * 1024 * 1024):
    """raw_rows: (R,) f32 raw parameter per output row. Returns (R, M)."""
    R = raw_rows.shape[0]
    itemsize = jnp.dtype(out_dtype).itemsize

    # ---- lane (last-dim) block: full M when it fits, else a multiple of 128
    if M <= 128 or M * itemsize * 8 <= target_block_bytes:
        bm = M                                   # equals full array dim -> always valid
    else:
        bm = max(128, (target_block_bytes // (8 * itemsize) // 128) * 128)
        bm = min(bm, (M // 128) * 128)           # multiple of 128 -> valid

    # ---- row (sublane) block: multiple of 8 (or full R), sized to VMEM budget
    rows_budget = max(1, target_block_bytes // (bm * itemsize))
    if rows_budget >= R:
        br = R                                   # equals full array dim -> valid
    else:
        br = min(R, max(8, (rows_budget // 8) * 8))
        if br % 8 != 0:                          # only possible when br == R
            br = R

    grid = (pl.cdiv(R, br), pl.cdiv(M, bm))
    v_2d = raw_rows.astype(jnp.float32).reshape(R, 1)

    out = pl.pallas_call(
        _make_fill_kernel(link),
        out_shape=jax.ShapeDtypeStruct((R, M), out_dtype),
        grid=grid,
        in_specs=[pl.BlockSpec((br, 1), lambda i, j: (i, 0))],
        out_specs=pl.BlockSpec((br, bm), lambda i, j: (i, j)),
        compiler_params=pltpu.CompilerParams(
            dimension_semantics=("parallel", "parallel"),
            vmem_limit_bytes=40 * 1024 * 1024,
        ),
    )(v_2d)
    return out


# --------------------------------------------------------------------------
# Module-equivalent wrapper
# --------------------------------------------------------------------------
class Constant:
    """Constant kernel: covariance independent of the inputs."""

    def __init__(self, variance, f="exp", dtype=jnp.float32):
        variance = jnp.asarray(variance, dtype)
        self.f = f
        self.dtype = dtype
        if f == "exp":
            self._variance = jnp.log(variance)
        elif f == "softplus":
            self._variance = jnp.where(variance > 30.0, variance,
                                       jnp.log(jnp.expm1(variance)))
        elif f == "relu":
            self._variance = variance
        else:
            raise NotImplementedError("Link function is not supported.")

    @property
    def variance(self):
        if self.f == "exp":
            v = jnp.exp(self._variance)
        elif self.f == "softplus":
            v = jax.nn.softplus(self._variance)
        else:
            v = jnp.maximum(self._variance, 0.0)
        return v[None, :, None, None]

    def forward(self, X, Z=None, diag=False):
        if X.ndim != 4:
            raise ValueError("Input X must be of shape (K x N x T x D).")
        if Z is None:
            Z = X
        if Z.ndim != 4:
            raise ValueError("Input Z must be of shape (K x N x T x D).")

        # Only static shapes of X / Z are used; they are never DMA'd.
        K = X.shape[0]
        T_x = X.shape[2]
        T_z = Z.shape[2]
        N = self._variance.shape[0]

        # Per-output-row raw parameter: row = k*N + n  ->  _variance[n]
        raw_rows = jnp.tile(self._variance.astype(jnp.float32), K)  # (K*N,)

        if diag:
            flat = _constant_fill(raw_rows, T_x, link=self.f, out_dtype=self.dtype)
            return flat.reshape(K, N, T_x)
        else:
            flat = _constant_fill(raw_rows, T_x * T_z, link=self.f, out_dtype=self.dtype)
            return flat.reshape(K, N, T_x, T_z)

    __call__ = forward


# --------------------------------------------------------------------------
# Demo / self-test
# --------------------------------------------------------------------------
if __name__ == "__main__":
    key = jax.random.PRNGKey(0)
    K, N, T_x, T_z, D = 2, 4, 16, 8, 3
    kx, kz, kv = jax.random.split(key, 3)

    X = jax.random.normal(kx, (K, N, T_x, D), jnp.float32)
    Z = jax.random.normal(kz, (K, N, T_z, D), jnp.float32)
    variance = jax.random.uniform(kv, (N,), jnp.float32, minval=0.5, maxval=2.0)

    kern = Constant(variance, f="exp")

    full = kern.forward(X, Z, diag=False)   # (K, N, T_x, T_z)
    diag = kern.forward(X, None, diag=True)  # (K, N, T_x)
    jax.block_until_ready((full, diag))

    # Reference (pure JAX) check of the broadcast semantics.
    ref_full = jnp.broadcast_to(variance[None, :, None, None], (K, N, T_x, T_z))
    ref_diag = jnp.broadcast_to(variance[None, :, None], (K, N, T_x))

    assert full.shape == (K, N, T_x, T_z)
    assert diag.shape == (K, N, T_x)
    assert jnp.allclose(full, ref_full, rtol=1e-5, atol=1e-6)
    assert jnp.allclose(diag, ref_diag, rtol=1e-5, atol=1e-6)

    print("KERNEL_OK")
</pallas_src>

<mosaic_0001>
module attributes {stable_mosaic.version = 11 : i64} {
  func.func @kernel(%arg0: i32, %arg1: i32, %arg2: memref<8x1xf32, #tpu.memory_space<vmem>>, %arg3: memref<8x128xf32, #tpu.memory_space<vmem>>) attributes {dimension_semantics = [#tpu.dimension_semantics<parallel>, #tpu.dimension_semantics<parallel>], iteration_bounds = array<i64: 1, 1>, scalar_prefetch = 0 : i64, scratch_operands = 0 : i64, tpu.core_type = #tpu.core_type<tc>, window_params = [{transform_indices = @transform_0, window_bounds = array<i64: 8, 1>}, {transform_indices = @transform_1, window_bounds = array<i64: 8, 128>}]} {
    %c0 = arith.constant 0 : index
    %c0_0 = arith.constant 0 : index
    %0 = vector.load %arg2[%c0, %c0_0] : memref<8x1xf32, #tpu.memory_space<vmem>>, vector<8x1xf32>
    %1 = math.exp %0 : vector<8x1xf32>
    %2 = vector.shape_cast %1 : vector<8x1xf32> to vector<8x1xf32>
    %3 = vector.broadcast %2 : vector<8x1xf32> to vector<8x128xf32>
    %c0_1 = arith.constant 0 : index
    %c0_2 = arith.constant 0 : index
    %4 = vector.load %arg3[%c0_1, %c0_2] : memref<8x128xf32, #tpu.memory_space<vmem>>, vector<8x128xf32>
    tpu.vector_store %arg3[%c0_1, %c0_2], %3 {strides = array<i32>} : memref<8x128xf32, #tpu.memory_space<vmem>>, vector<8x128xf32>,
    return
  }
  func.func @transform_0(%arg0: i32, %arg1: i32) -> (i32, i32) {
    %c0_i32 = arith.constant 0 : i32
    %c0_i32_0 = arith.constant 0 : i32
    return %arg0, %c0_i32 : i32, i32
  }
  func.func @transform_1(%arg0: i32, %arg1: i32) -> (i32, i32) {
    %c0_i32 = arith.constant 0 : i32
    return %arg0, %arg1 : i32, i32
  }
}

</mosaic_0001>

<llo_original>
// kernel: tpu_custom_call.1
$region0: #{tpu_custom_call.1}
  #allocation0 [shape = 'u32[]', space=smem, size = 0x4, offset = 0x4, fixed_abs, tag = 'smem constant byte address 0x4 - core index']
  #allocation1 [shape = 'u32[144,128]{1,0:T(1,128)}', space=vmem, size = 0x12000, scoped, tag = 'internal scratch']
  %s0 = inlined_call_operand.vmem [shape: f32[8,1], index: 0, kind: input, shape index: {}]
  %s1 = inlined_call_operand.hbm [shape: f32[8,128], index: 1, kind: output, shape index: {}]
  %s2 = sld [smem:[#allocation0]]
  $region14: #{tpu_custom_call.1} parent=0
    _
  %s4 = ssub.s32 1, %s2
  %s5 = scalar_select 0, %s4, %s2
  $region1: #{tpu_custom_call.1} parent=0
    #allocation2 [shape = 'u8[4096]{0}', space=vmem, size = 0x1000, scoped, tag = 'output window, operand 0, single buffered']
    #allocation3 [shape = 's32[1]{0}', space=sflag, size = 0x4, scoped, tag = 'scoped memory for tpu_custom_call.1']
    %6 = vsyncpa [#allocation3], 0
    // Predicated region
    $region2: #{tpu_custom_call.1} parent=1 // pred_check
      _
    $region3: #{tpu_custom_call.1} parent=1 // pred_check_branch
      %8 = sbr.rel (0) target = $region5
    $region4: #{tpu_custom_call.1} parent=1 // pred_region
      _
    $region5: #{tpu_custom_call.1} parent=1 // pred_fallthru
      _
    %v9 = vld [vmem:[%s0] sm:$0xff]
    %v10 = vmul.f32 %v9, 1.442695
    %v11 = vpow.pop %v10
    %13 = vset.pattern.permute.xlu0 0
    %14 = vperm.xlu0 %13, %v11
    %v15 = vpop.permute.xlu0 %14
    %17 = vst [vmem:[#allocation2] sm:$0xff] %v15
    // Predicated region
    $region6: #{tpu_custom_call.1} parent=1 // pred_check
      _
    $region7: #{tpu_custom_call.1} parent=1 // pred_check_branch
      %19 = sbr.rel (0) target = $region9
    $region8: #{tpu_custom_call.1} parent=1 // pred_region
      %s21 = ssub.s32 128, 128
      %22 = vsyncadd [#allocation3], %s21
      %s24 = sshll.u32 [#allocation2], 4
      %s25 = int_to_ptr.vmem [resolvable:$true] %s24
      %27 = dma.vmem_to_hbm [thread:$0]  %s25, 128, %s1, [#allocation3]
    $region9: #{tpu_custom_call.1} parent=1 // pred_fallthru
      _
    // Predicated region
    $region10: #{tpu_custom_call.1} parent=1 // pred_check
      _
    $region11: #{tpu_custom_call.1} parent=1 // pred_check_branch
      %29 = sbr.rel (0) target = $region13
    $region12: #{tpu_custom_call.1} parent=1 // pred_region
      %30 = dma.done [#allocation3], 128
    $region13: #{tpu_custom_call.1} parent=1 // pred_fallthru
      _
    %31 = vsyncpa [#allocation3], 1

</llo_original>
